<compile_context>
chip_gen: v6e
topology: v6e:2x2x1
jax: 0.10.0
libtpu: 0.0.40
codegen_flags: <defaults>
</compile_context>

<pallas_src>
import numpy as np
import jax
import jax.numpy as jnp
from jax import lax
from jax.experimental import pallas as pl
from jax.experimental.pallas import tpu as pltpu

TWO_PI = 2.0 * np.pi


def graph_conv_kernel(params_ref, v_ref, rho_ref, theta_ref, adj_ref, top_ref,
                      wcat_ref, e_ref, out_ref):
    """One (batch, row-tile) step.

    params_ref: (4, M, 1)   rows = [mean_rho, mean_theta, scale_rho, scale_theta]
                            with scale = -0.5 / (1e-14 + precision**2) precomputed
    v_ref:      (1, N, F)   all node features of this batch element
    rho_ref:    (1, K, TN)  rho pre-gathered at the top-K neighbours (lane = rows)
    theta_ref:  (1, K, TN)  theta pre-gathered at the top-K neighbours
    adj_ref:    (1, K, TN)  adjacency weights
    top_ref:    (1, K, TN)  neighbour indices (int32)
    wcat_ref:   (F, P)      [W_0 | W_1 | ... | W_{M-1}] zero-padded to P lanes
    e_ref:      (M, P)      block-selection mask, e[m, m*Fo:(m+1)*Fo] = 1
    out_ref:    (1, TN, P)  lane-dense padded output slab
    """
    v = v_ref[0]                       # (N, F)
    rho_g = rho_ref[0]                 # (K, TN)
    theta_g = theta_ref[0]             # (K, TN)
    adj = adj_ref[0]                   # (K, TN)
    top = top_ref[0]                   # (K, TN) int32
    params = params_ref[...]           # (4, M, 1)
    e = e_ref[...]                     # (M, P)

    N, F = v.shape
    K, TN = top.shape
    M = params.shape[1]
    P = e.shape[1]

    # --- Gaussian kernel weights on the gathered coords: (K, M, TN) ----------
    mean_rho, mean_theta = params[0:1], params[1:2]        # (1, M, 1)
    scale_rho, scale_theta = params[2:3], params[3:4]      # -0.5/(1e-14+prec^2)
    d_rho = rho_g[:, None, :] - mean_rho                   # (K, M, TN)
    w_rho = jnp.exp(scale_rho * d_rho * d_rho)
    first = jnp.abs(theta_g[:, None, :] - mean_theta)
    second = jnp.abs(TWO_PI - first)
    ang = jnp.minimum(first, second)
    gw = w_rho * jnp.exp(scale_theta * ang * ang)          # (K, M, TN)
    # NaN coords -> zero weight (matches reference; exp of finite args can't be
    # NaN, so checking the (K, TN) inputs is equivalent and M x cheaper).
    bad = jnp.isnan(rho_g) | jnp.isnan(theta_g)
    gw = jnp.where(bad[:, None, :], 0.0, gw)
    denom = jnp.sum(gw, axis=1, keepdims=True) + 1e-14     # (K, 1, TN)
    # Exact reciprocal keeps the rtol=1e-4 check; approx=True would move the
    # divide fully onto the EUP slot if a looser tolerance is acceptable.
    cw = gw * (pl.reciprocal(denom) * adj[:, None, :])     # adj folded in

    # --- one-hot neighbour-feature gather: one MXU matmul --------------------
    # NOTE: out-of-range / negative indices gather zero here (torch.gather
    # would error); identical for valid ids.
    # TODO(synk): cast maskf/v to bf16 for ~3x MXU rate on v5e/v6e/v7x if the
    # caller tolerates bf16 rounding of v (the 0/1 mask itself is lossless).
    # TODO(synk): for very large N, chunk this block over the N axis with a
    # lax.fori_loop so maskf (the only remaining O(K*TN*N) temp, K*TN*N*4 B)
    # stays near vreg-resident.
    col = lax.broadcasted_iota(jnp.int32, (K, TN, N), 2)
    maskf = (top[:, :, None] == col).astype(jnp.float32)   # built once, reused
    sv = jnp.dot(maskf.reshape(K * TN, N), v,
                 preferred_element_type=jnp.float32)        # (K*TN, F), exact

    # --- project once for all M kernels: lane-dense (K, TN, P) on the MXU ----
    pv = jnp.dot(sv, wcat_ref[...],
                 preferred_element_type=jnp.float32).reshape(K, TN, P)

    # --- weighted aggregation over K, block-selected over M ------------------
    # out[t, m*Fo + o] = sum_k cw[k, m, t] * pv[k, t, m*Fo + o]
    acc = jnp.zeros((TN, P), jnp.float32)
    for m in range(M):                                      # M small, static
        acc = acc + jnp.sum(cw[:, m, :, None] * pv, axis=0) * e[m:m + 1, :]
    out_ref[0] = acc.astype(out_ref.dtype)                  # full-lane store


def _vmem_capacity_bytes():
    try:
        info = pltpu.get_tpu_info()
        cap = getattr(info, "vmem_capacity_bytes", None)
        if cap:
            return int(cap)
    except Exception:
        pass
    return 128 * 1024 * 1024


def graph_conv(v, coord, adj_matrix, top_ind,
               mean_rho, mean_theta, precision_rho, precision_theta, W,
               *, row_tile=None):
    B, N, F = v.shape
    K = adj_matrix.shape[-1]
    M, _, Fo = W.shape
    mid = M * Fo
    P = ((mid + 127) // 128) * 128                      # lane-dense padded width

    vmem_cap = _vmem_capacity_bytes()
    if row_tile is None:
        # v7x has 64 MiB physical VMEM -> smaller row tiles than v5e/v6e.
        row_tile = 128 if vmem_cap < (96 << 20) else 256
    TN = N if (N <= row_tile or N % row_tile) else row_tile
    NT = N // TN

    # --- layout plumbing in the wrapper (layout, not compute hoisting) -------
    rho = coord[..., 0].astype(jnp.float32)                             # (B,N,N)
    theta = coord[..., 1].astype(jnp.float32)
    # Pre-gather coords at the top-K neighbours: the kernel then touches only
    # O(K*N) coord values per batch instead of the O(N^2) pairwise tensor.
    rho_g = jnp.transpose(jnp.take_along_axis(rho, top_ind, axis=2),
                          (0, 2, 1)).astype(jnp.float32)                # (B,K,N)
    theta_g = jnp.transpose(jnp.take_along_axis(theta, top_ind, axis=2),
                            (0, 2, 1)).astype(jnp.float32)              # (B,K,N)
    adj_t = jnp.transpose(adj_matrix, (0, 2, 1)).astype(jnp.float32)    # (B,K,N)
    top_t = jnp.transpose(top_ind, (0, 2, 1)).astype(jnp.int32)         # (B,K,N)

    # Gaussian parameters packed with precomputed inverse-variance scales.
    params = jnp.stack([
        mean_rho.reshape(M),
        mean_theta.reshape(M),
        -0.5 / (1e-14 + precision_rho.reshape(M) ** 2),
        -0.5 / (1e-14 + precision_theta.reshape(M) ** 2),
    ], axis=0).astype(jnp.float32).reshape(4, M, 1)

    # Concatenated per-kernel projection weights, zero-padded to P lanes.
    w_cat = jnp.concatenate([W[m] for m in range(M)], axis=-1)          # (F,mid)
    w_pad = jnp.zeros((F, P), jnp.float32).at[:, :mid].set(
        w_cat.astype(jnp.float32))
    # Block-selection mask: e[m, m*Fo:(m+1)*Fo] = 1 (pad lanes stay 0).
    e_np = np.zeros((M, P), np.float32)
    for m in range(M):
        e_np[m, m * Fo:(m + 1) * Fo] = 1.0
    e_sel = jnp.asarray(e_np)

    # VMEM budget: double-buffered blocks + in-kernel temps + headroom,
    # capped well below the physical capacity of this generation.
    block_bytes = 4 * (N * F + 4 * K * TN + F * P + M * P + TN * P + 4 * M)
    temp_bytes = 4 * (K * TN * N + K * TN * F + 2 * K * TN * P + 4 * K * M * TN)
    vmem_limit = int(min(vmem_cap // 2,
                         max(32 << 20, 2 * block_bytes + temp_bytes + (4 << 20))))

    out = pl.pallas_call(
        graph_conv_kernel,
        out_shape=jax.ShapeDtypeStruct((B, N, P), jnp.float32),
        grid=(B, NT),
        in_specs=[
            pl.BlockSpec((4, M, 1), lambda b, r: (0, 0, 0)),
            pl.BlockSpec((1, N, F), lambda b, r: (b, 0, 0)),
            pl.BlockSpec((1, K, TN), lambda b, r: (b, 0, r)),
            pl.BlockSpec((1, K, TN), lambda b, r: (b, 0, r)),
            pl.BlockSpec((1, K, TN), lambda b, r: (b, 0, r)),
            pl.BlockSpec((1, K, TN), lambda b, r: (b, 0, r)),
            pl.BlockSpec((F, P), lambda b, r: (0, 0)),
            pl.BlockSpec((M, P), lambda b, r: (0, 0)),
        ],
        out_specs=pl.BlockSpec((1, TN, P), lambda b, r: (b, r, 0)),
        compiler_params=pltpu.CompilerParams(
            dimension_semantics=("parallel", "parallel"),
            vmem_limit_bytes=vmem_limit),
    )(params, v.astype(jnp.float32), rho_g, theta_g, adj_t, top_t, w_pad, e_sel)
    return out[..., :mid]


def reference_graph_conv(v, coord, adj, top, mean_rho, mean_theta,
                         prec_rho, prec_theta, W):
    """Pure-JAX replica of the PyTorch forward for verification."""
    B, N, F = v.shape
    K = adj.shape[-1]
    M, _, Fo = W.shape

    mr = mean_rho.reshape(1, 1, 1, M)
    mt = mean_theta.reshape(1, 1, 1, M)
    pr = prec_rho.reshape(1, 1, 1, M)
    pt = prec_theta.reshape(1, 1, 1, M)

    rho = coord[..., 0:1]
    theta = coord[..., 1:2]
    w_rho = jnp.exp(-0.5 * (rho - mr) ** 2 / (1e-14 + pr ** 2))
    first = jnp.abs(theta - mt)
    second = jnp.abs(TWO_PI - first)
    w = w_rho * jnp.exp(-0.5 * jnp.minimum(first, second) ** 2 / (1e-14 + pt ** 2))
    w = jnp.where(jnp.isnan(w), 0.0, w)
    w = w / (jnp.sum(w, axis=-1, keepdims=True) + 1e-14)        # (B,N,N,M)

    conv_v = jnp.broadcast_to(v[:, None], (B, N, N, F))
    sparse_v = jnp.take_along_axis(
        conv_v, jnp.broadcast_to(top[..., None], (B, N, K, F)), axis=2)
    sparse_w = jnp.take_along_axis(
        w, jnp.broadcast_to(top[..., None], (B, N, K, M)), axis=2)
    attentive = sparse_v * adj[..., None]
    wn = jnp.einsum('bikm,bikf->bimf', sparse_w, attentive)
    out = jnp.einsum('bimf,mfo->bimo', wn, W)
    return out.reshape(B, N, M * Fo)


if __name__ == "__main__":
    B, N, F = 2, 8, 32          # batch, num_obj, v_features
    M = 4                       # num_kernels
    MID = 32                    # mid_features
    K = 4                       # top-K neighbours
    Fo = MID // M

    key = jax.random.PRNGKey(0)
    keys = jax.random.split(key, 10)

    v = jax.random.normal(keys[0], (B, N, F), dtype=jnp.float32)
    coord_rho = jax.random.uniform(keys[1], (B, N, N, 1), minval=0.0, maxval=1.0)
    coord_theta = jax.random.uniform(keys[2], (B, N, N, 1),
                                     minval=-np.pi, maxval=np.pi)
    coord = jnp.concatenate([coord_rho, coord_theta], axis=-1).astype(jnp.float32)
    adj_logits = jax.random.normal(keys[3], (B, N, K), dtype=jnp.float32)
    adj_matrix = jax.nn.softmax(adj_logits, axis=-1)            # rows sum to 1
    top_ind = jax.random.randint(keys[4], (B, N, K), 0, N, dtype=jnp.int32)

    # Deterministic "parameters" (same shapes as the PyTorch module's init).
    mean_rho = jax.random.uniform(keys[5], (M, 1), minval=0.0, maxval=1.0)
    mean_theta = jax.random.uniform(keys[6], (M, 1), minval=-np.pi, maxval=np.pi)
    precision_rho = jax.random.uniform(keys[7], (M, 1), minval=0.0, maxval=1.0)
    precision_theta = jax.random.uniform(keys[8], (M, 1), minval=0.0, maxval=1.0)
    bound = 1.0 / np.sqrt(F)
    # Stacked Linear(F -> Fo, bias=False) weights, one per kernel, as [M, F, Fo].
    W = jax.random.uniform(keys[9], (M, F, Fo), minval=-bound, maxval=bound,
                           dtype=jnp.float32)

    out = graph_conv(v, coord, adj_matrix, top_ind,
                     mean_rho, mean_theta, precision_rho, precision_theta, W)
    out = jax.block_until_ready(out)

    ref = reference_graph_conv(v, coord, adj_matrix, top_ind,
                               mean_rho, mean_theta, precision_rho,
                               precision_theta, W)
    ref = jax.block_until_ready(ref)

    assert out.shape == (B, N, MID)
    np.testing.assert_allclose(np.asarray(out), np.asarray(ref),
                               rtol=1e-4, atol=1e-5)
    print("KERNEL_OK")
</pallas_src>

<mosaic_0001>
module attributes {stable_mosaic.version = 11 : i64} {
  func.func @graph_conv_kernel(%arg0: i32, %arg1: i32, %arg2: memref<4x4x1xf32, #tpu.memory_space<vmem>>, %arg3: memref<1x8x32xf32, #tpu.memory_space<vmem>>, %arg4: memref<1x4x8xf32, #tpu.memory_space<vmem>>, %arg5: memref<1x4x8xf32, #tpu.memory_space<vmem>>, %arg6: memref<1x4x8xf32, #tpu.memory_space<vmem>>, %arg7: memref<1x4x8xi32, #tpu.memory_space<vmem>>, %arg8: memref<32x128xf32, #tpu.memory_space<vmem>>, %arg9: memref<4x128xf32, #tpu.memory_space<vmem>>, %arg10: memref<1x8x128xf32, #tpu.memory_space<vmem>>) attributes {dimension_semantics = [#tpu.dimension_semantics<parallel>, #tpu.dimension_semantics<parallel>], iteration_bounds = array<i64: 2, 1>, scalar_prefetch = 0 : i64, scratch_operands = 0 : i64, tpu.core_type = #tpu.core_type<tc>, window_params = [{pipeline_mode = #tpu.pipeline_mode<synchronous>, transform_indices = @transform_0, window_bounds = array<i64: 4, 4, 1>}, {transform_indices = @transform_1, window_bounds = array<i64: 1, 8, 32>}, {transform_indices = @transform_2, window_bounds = array<i64: 1, 4, 8>}, {transform_indices = @transform_3, window_bounds = array<i64: 1, 4, 8>}, {transform_indices = @transform_4, window_bounds = array<i64: 1, 4, 8>}, {transform_indices = @transform_5, window_bounds = array<i64: 1, 4, 8>}, {pipeline_mode = #tpu.pipeline_mode<synchronous>, transform_indices = @transform_6, window_bounds = array<i64: 32, 128>}, {pipeline_mode = #tpu.pipeline_mode<synchronous>, transform_indices = @transform_7, window_bounds = array<i64: 4, 128>}, {transform_indices = @transform_8, window_bounds = array<i64: 1, 8, 128>}]} {
    %c0 = arith.constant 0 : index
    %c0_0 = arith.constant 0 : index
    %c0_1 = arith.constant 0 : index
    %0 = vector.load %arg3[%c0, %c0_0, %c0_1] : memref<1x8x32xf32, #tpu.memory_space<vmem>>, vector<1x8x32xf32>
    %1 = vector.shape_cast %0 : vector<1x8x32xf32> to vector<8x32xf32>
    %c0_2 = arith.constant 0 : index
    %c0_3 = arith.constant 0 : index
    %c0_4 = arith.constant 0 : index
    %2 = vector.load %arg4[%c0_2, %c0_3, %c0_4] : memref<1x4x8xf32, #tpu.memory_space<vmem>>, vector<1x4x8xf32>
    %3 = vector.shape_cast %2 : vector<1x4x8xf32> to vector<4x8xf32>
    %c0_5 = arith.constant 0 : index
    %c0_6 = arith.constant 0 : index
    %c0_7 = arith.constant 0 : index
    %4 = vector.load %arg5[%c0_5, %c0_6, %c0_7] : memref<1x4x8xf32, #tpu.memory_space<vmem>>, vector<1x4x8xf32>
    %5 = vector.shape_cast %4 : vector<1x4x8xf32> to vector<4x8xf32>
    %c0_8 = arith.constant 0 : index
    %c0_9 = arith.constant 0 : index
    %c0_10 = arith.constant 0 : index
    %6 = vector.load %arg6[%c0_8, %c0_9, %c0_10] : memref<1x4x8xf32, #tpu.memory_space<vmem>>, vector<1x4x8xf32>
    %7 = vector.shape_cast %6 : vector<1x4x8xf32> to vector<4x8xf32>
    %c0_11 = arith.constant 0 : index
    %c0_12 = arith.constant 0 : index
    %c0_13 = arith.constant 0 : index
    %8 = vector.load %arg7[%c0_11, %c0_12, %c0_13] : memref<1x4x8xi32, #tpu.memory_space<vmem>>, vector<1x4x8xi32>
    %9 = vector.shape_cast %8 : vector<1x4x8xi32> to vector<4x8xi32>
    %c0_14 = arith.constant 0 : index
    %c0_15 = arith.constant 0 : index
    %c0_16 = arith.constant 0 : index
    %10 = vector.load %arg2[%c0_14, %c0_15, %c0_16] : memref<4x4x1xf32, #tpu.memory_space<vmem>>, vector<4x4x1xf32>
    %c0_17 = arith.constant 0 : index
    %c0_18 = arith.constant 0 : index
    %11 = vector.load %arg9[%c0_17, %c0_18] : memref<4x128xf32, #tpu.memory_space<vmem>>, vector<4x128xf32>
    %12 = vector.extract_strided_slice %10 {offsets = [0, 0, 0], sizes = [1, 4, 1], strides = [1, 1, 1]} : vector<4x4x1xf32> to vector<1x4x1xf32>
    %13 = vector.extract_strided_slice %10 {offsets = [1, 0, 0], sizes = [1, 4, 1], strides = [1, 1, 1]} : vector<4x4x1xf32> to vector<1x4x1xf32>
    %14 = vector.extract_strided_slice %10 {offsets = [2, 0, 0], sizes = [1, 4, 1], strides = [1, 1, 1]} : vector<4x4x1xf32> to vector<1x4x1xf32>
    %15 = vector.extract_strided_slice %10 {offsets = [3, 0, 0], sizes = [1, 4, 1], strides = [1, 1, 1]} : vector<4x4x1xf32> to vector<1x4x1xf32>
    %16 = vector.shape_cast %3 : vector<4x8xf32> to vector<4x1x8xf32>
    %17 = vector.broadcast %16 : vector<4x1x8xf32> to vector<4x4x8xf32>
    %18 = vector.broadcast %12 : vector<1x4x1xf32> to vector<4x4x8xf32>
    %19 = arith.subf %17, %18 : vector<4x4x8xf32>
    %20 = vector.broadcast %14 : vector<1x4x1xf32> to vector<4x4x8xf32>
    %21 = arith.mulf %20, %19 : vector<4x4x8xf32>
    %22 = arith.mulf %21, %19 : vector<4x4x8xf32>
    %23 = math.exp %22 : vector<4x4x8xf32>
    %24 = vector.shape_cast %5 : vector<4x8xf32> to vector<4x1x8xf32>
    %25 = vector.broadcast %24 : vector<4x1x8xf32> to vector<4x4x8xf32>
    %26 = vector.broadcast %13 : vector<1x4x1xf32> to vector<4x4x8xf32>
    %27 = arith.subf %25, %26 : vector<4x4x8xf32>
    %28 = math.absf %27 : vector<4x4x8xf32>
    %cst = arith.constant 6.28318548 : f32
    %29 = vector.broadcast %cst : f32 to vector<4x4x8xf32>
    %30 = arith.subf %29, %28 : vector<4x4x8xf32>
    %31 = math.absf %30 : vector<4x4x8xf32>
    %32 = arith.minimumf %28, %31 : vector<4x4x8xf32>
    %33 = vector.broadcast %15 : vector<1x4x1xf32> to vector<4x4x8xf32>
    %34 = arith.mulf %33, %32 : vector<4x4x8xf32>
    %35 = arith.mulf %34, %32 : vector<4x4x8xf32>
    %36 = math.exp %35 : vector<4x4x8xf32>
    %37 = arith.mulf %23, %36 : vector<4x4x8xf32>
    %38 = arith.cmpf one, %3, %3 : vector<4x8xf32>
    %39 = arith.cmpf one, %5, %5 : vector<4x8xf32>
    %40 = arith.ori %38, %39 : vector<4x8xi1>
    %41 = vector.shape_cast %40 : vector<4x8xi1> to vector<4x1x8xi1>
    %cst_19 = arith.constant 0.000000e+00 : f32
    %42 = vector.shape_cast %41 : vector<4x1x8xi1> to vector<4x1x8xi1>
    %43 = vector.broadcast %42 : vector<4x1x8xi1> to vector<4x4x8xi1>
    %44 = vector.broadcast %cst_19 : f32 to vector<4x4x8xf32>
    %45 = arith.select %43, %44, %37 : vector<4x4x8xi1>, vector<4x4x8xf32>
    %cst_20 = arith.constant dense<0.000000e+00> : vector<4x8xf32>
    %46 = vector.multi_reduction <add>, %45, %cst_20 [1] : vector<4x4x8xf32> to vector<4x8xf32>
    %47 = vector.shape_cast %46 : vector<4x8xf32> to vector<4x1x8xf32>
    %cst_21 = arith.constant 9.99999982E-15 : f32
    %48 = vector.broadcast %cst_21 : f32 to vector<4x1x8xf32>
    %49 = arith.addf %47, %48 : vector<4x1x8xf32>
    %50 = tpu.reciprocal %49 : vector<4x1x8xf32> -> vector<4x1x8xf32>
    %51 = vector.shape_cast %7 : vector<4x8xf32> to vector<4x1x8xf32>
    %52 = arith.mulf %50, %51 : vector<4x1x8xf32>
    %53 = vector.broadcast %52 : vector<4x1x8xf32> to vector<4x4x8xf32>
    %54 = arith.mulf %45, %53 : vector<4x4x8xf32>
    %55 = tpu.iota {dimensions = array<i32: 2>} : vector<4x8x8xi32>
    %56 = vector.shape_cast %9 : vector<4x8xi32> to vector<4x8x1xi32>
    %57 = vector.broadcast %56 : vector<4x8x1xi32> to vector<4x8x8xi32>
    %58 = arith.cmpi eq, %57, %55 : vector<4x8x8xi32>
    %59 = arith.extui %58 : vector<4x8x8xi1> to vector<4x8x8xi32>
    %60 = arith.sitofp %59 : vector<4x8x8xi32> to vector<4x8x8xf32>
    %61 = vector.shape_cast %60 : vector<4x8x8xf32> to vector<32x8xf32>
    %cst_22 = arith.constant dense<0.000000e+00> : vector<32x32xf32>
    %62 = tpu.matmul %61, %1, %cst_22 {dimension_numbers = #tpu.dot_dimension_numbers<[1], [0], [0], [1], [0, 0, 1, 1], [], []>} : vector<32x8xf32>, vector<8x32xf32>, vector<32x32xf32> -> vector<32x32xf32>
    %c0_23 = arith.constant 0 : index
    %c0_24 = arith.constant 0 : index
    %63 = vector.load %arg8[%c0_23, %c0_24] : memref<32x128xf32, #tpu.memory_space<vmem>>, vector<32x128xf32>
    %cst_25 = arith.constant dense<0.000000e+00> : vector<32x128xf32>
    %64 = tpu.matmul %62, %63, %cst_25 {dimension_numbers = #tpu.dot_dimension_numbers<[1], [0], [0], [1], [0, 0, 1, 1], [], []>} : vector<32x32xf32>, vector<32x128xf32>, vector<32x128xf32> -> vector<32x128xf32>
    %65 = vector.shape_cast %64 : vector<32x128xf32> to vector<4x8x128xf32>
    %cst_26 = arith.constant 0.000000e+00 : f32
    %66 = vector.broadcast %cst_26 : f32 to vector<8x128xf32>
    %67 = vector.extract_strided_slice %54 {offsets = [0, 0, 0], sizes = [4, 1, 8], strides = [1, 1, 1]} : vector<4x4x8xf32> to vector<4x1x8xf32>
    %68 = vector.shape_cast %67 : vector<4x1x8xf32> to vector<4x8xf32>
    %69 = vector.shape_cast %68 : vector<4x8xf32> to vector<4x8x1xf32>
    %70 = vector.broadcast %69 : vector<4x8x1xf32> to vector<4x8x128xf32>
    %71 = arith.mulf %70, %65 : vector<4x8x128xf32>
    %cst_27 = arith.constant dense<0.000000e+00> : vector<8x128xf32>
    %72 = vector.multi_reduction <add>, %71, %cst_27 [0] : vector<4x8x128xf32> to vector<8x128xf32>
    %73 = vector.extract_strided_slice %11 {offsets = [0, 0], sizes = [1, 128], strides = [1, 1]} : vector<4x128xf32> to vector<1x128xf32>
    %74 = vector.broadcast %73 : vector<1x128xf32> to vector<8x128xf32>
    %75 = arith.mulf %72, %74 : vector<8x128xf32>
    %76 = arith.addf %66, %75 : vector<8x128xf32>
    %77 = vector.extract_strided_slice %54 {offsets = [0, 1, 0], sizes = [4, 1, 8], strides = [1, 1, 1]} : vector<4x4x8xf32> to vector<4x1x8xf32>
    %78 = vector.shape_cast %77 : vector<4x1x8xf32> to vector<4x8xf32>
    %79 = vector.shape_cast %78 : vector<4x8xf32> to vector<4x8x1xf32>
    %80 = vector.broadcast %79 : vector<4x8x1xf32> to vector<4x8x128xf32>
    %81 = arith.mulf %80, %65 : vector<4x8x128xf32>
    %cst_28 = arith.constant dense<0.000000e+00> : vector<8x128xf32>
    %82 = vector.multi_reduction <add>, %81, %cst_28 [0] : vector<4x8x128xf32> to vector<8x128xf32>
    %83 = vector.extract_strided_slice %11 {offsets = [1, 0], sizes = [1, 128], strides = [1, 1]} : vector<4x128xf32> to vector<1x128xf32>
    %84 = vector.broadcast %83 : vector<1x128xf32> to vector<8x128xf32>
    %85 = arith.mulf %82, %84 : vector<8x128xf32>
    %86 = arith.addf %76, %85 : vector<8x128xf32>
    %87 = vector.extract_strided_slice %54 {offsets = [0, 2, 0], sizes = [4, 1, 8], strides = [1, 1, 1]} : vector<4x4x8xf32> to vector<4x1x8xf32>
    %88 = vector.shape_cast %87 : vector<4x1x8xf32> to vector<4x8xf32>
    %89 = vector.shape_cast %88 : vector<4x8xf32> to vector<4x8x1xf32>
    %90 = vector.broadcast %89 : vector<4x8x1xf32> to vector<4x8x128xf32>
    %91 = arith.mulf %90, %65 : vector<4x8x128xf32>
    %cst_29 = arith.constant dense<0.000000e+00> : vector<8x128xf32>
    %92 = vector.multi_reduction <add>, %91, %cst_29 [0] : vector<4x8x128xf32> to vector<8x128xf32>
    %93 = vector.extract_strided_slice %11 {offsets = [2, 0], sizes = [1, 128], strides = [1, 1]} : vector<4x128xf32> to vector<1x128xf32>
    %94 = vector.broadcast %93 : vector<1x128xf32> to vector<8x128xf32>
    %95 = arith.mulf %92, %94 : vector<8x128xf32>
    %96 = arith.addf %86, %95 : vector<8x128xf32>
    %97 = vector.extract_strided_slice %54 {offsets = [0, 3, 0], sizes = [4, 1, 8], strides = [1, 1, 1]} : vector<4x4x8xf32> to vector<4x1x8xf32>
    %98 = vector.shape_cast %97 : vector<4x1x8xf32> to vector<4x8xf32>
    %99 = vector.shape_cast %98 : vector<4x8xf32> to vector<4x8x1xf32>
    %100 = vector.broadcast %99 : vector<4x8x1xf32> to vector<4x8x128xf32>
    %101 = arith.mulf %100, %65 : vector<4x8x128xf32>
    %cst_30 = arith.constant dense<0.000000e+00> : vector<8x128xf32>
    %102 = vector.multi_reduction <add>, %101, %cst_30 [0] : vector<4x8x128xf32> to vector<8x128xf32>
    %103 = vector.extract_strided_slice %11 {offsets = [3, 0], sizes = [1, 128], strides = [1, 1]} : vector<4x128xf32> to vector<1x128xf32>
    %104 = vector.broadcast %103 : vector<1x128xf32> to vector<8x128xf32>
    %105 = arith.mulf %102, %104 : vector<8x128xf32>
    %106 = arith.addf %96, %105 : vector<8x128xf32>
    %c0_31 = arith.constant 0 : index
    %c0_32 = arith.constant 0 : index
    %c0_33 = arith.constant 0 : index
    %107 = vector.load %arg10[%c0_31, %c0_32, %c0_33] : memref<1x8x128xf32, #tpu.memory_space<vmem>>, vector<1x8x128xf32>
    %108 = vector.shape_cast %107 : vector<1x8x128xf32> to vector<8x128xf32>
    %109 = vector.shape_cast %106 : vector<8x128xf32> to vector<1x8x128xf32>
    tpu.vector_store %arg10[%c0_31, %c0_32, %c0_33], %109 {strides = array<i32>} : memref<1x8x128xf32, #tpu.memory_space<vmem>>, vector<1x8x128xf32>,
    return
  }
  func.func @transform_0(%arg0: i32, %arg1: i32) -> (i32, i32, i32) {
    %c0_i32 = arith.constant 0 : i32
    %c0_i32_0 = arith.constant 0 : i32
    %c0_i32_1 = arith.constant 0 : i32
    %c0_i32_2 = arith.constant 0 : i32
    return %c0_i32, %c0_i32_0, %c0_i32_1 : i32, i32, i32
  }
  func.func @transform_1(%arg0: i32, %arg1: i32) -> (i32, i32, i32) {
    %c0_i32 = arith.constant 0 : i32
    %c0_i32_0 = arith.constant 0 : i32
    %c0_i32_1 = arith.constant 0 : i32
    return %arg0, %c0_i32, %c0_i32_0 : i32, i32, i32
  }
  func.func @transform_2(%arg0: i32, %arg1: i32) -> (i32, i32, i32) {
    %c0_i32 = arith.constant 0 : i32
    %c0_i32_0 = arith.constant 0 : i32
    return %arg0, %c0_i32, %arg1 : i32, i32, i32
  }
  func.func @transform_3(%arg0: i32, %arg1: i32) -> (i32, i32, i32) {
    %c0_i32 = arith.constant 0 : i32
    %c0_i32_0 = arith.constant 0 : i32
    return %arg0, %c0_i32, %arg1 : i32, i32, i32
  }
  func.func @transform_4(%arg0: i32, %arg1: i32) -> (i32, i32, i32) {
    %c0_i32 = arith.constant 0 : i32
    %c0_i32_0 = arith.constant 0 : i32
    return %arg0, %c0_i32, %arg1 : i32, i32, i32
  }
  func.func @transform_5(%arg0: i32, %arg1: i32) -> (i32, i32, i32) {
    %c0_i32 = arith.constant 0 : i32
    %c0_i32_0 = arith.constant 0 : i32
    return %arg0, %c0_i32, %arg1 : i32, i32, i32
  }
  func.func @transform_6(%arg0: i32, %arg1: i32) -> (i32, i32) {
    %c0_i32 = arith.constant 0 : i32
    %c0_i32_0 = arith.constant 0 : i32
    %c0_i32_1 = arith.constant 0 : i32
    return %c0_i32, %c0_i32_0 : i32, i32
  }
  func.func @transform_7(%arg0: i32, %arg1: i32) -> (i32, i32) {
    %c0_i32 = arith.constant 0 : i32
    %c0_i32_0 = arith.constant 0 : i32
    %c0_i32_1 = arith.constant 0 : i32
    return %c0_i32, %c0_i32_0 : i32, i32
  }
  func.func @transform_8(%arg0: i32, %arg1: i32) -> (i32, i32, i32) {
    %c0_i32 = arith.constant 0 : i32
    %c0_i32_0 = arith.constant 0 : i32
    return %arg0, %arg1, %c0_i32 : i32, i32, i32
  }
}

</mosaic_0001>

<llo_original>
// kernel: tpu_custom_call.1
$region0: #{tpu_custom_call.1}
  #allocation0 [shape = 'u32[]', space=smem, size = 0x4, offset = 0x4, fixed_abs, tag = 'smem constant byte address 0x4 - core index']
  #allocation1 [shape = 'u32[144,128]{1,0:T(1,128)}', space=vmem, size = 0x12000, scoped, tag = 'internal scratch']
  %s0 = inlined_call_operand.vmem [shape: f32[4,4,1], index: 0, kind: input, shape index: {}]
  %s1 = inlined_call_operand.vmem [shape: f32[2,8,32], index: 1, kind: input, shape index: {}]
  %s2 = inlined_call_operand.hbm [shape: f32[2,4,8], index: 2, kind: input, shape index: {}]
  %s3 = inlined_call_operand.vmem [shape: f32[2,4,8], index: 3, kind: input, shape index: {}]
  %s4 = inlined_call_operand.hbm [shape: f32[2,4,8], index: 4, kind: input, shape index: {}]
  %s5 = inlined_call_operand.hbm [shape: s32[2,4,8], index: 5, kind: input, shape index: {}]
  %s6 = inlined_call_operand.hbm [shape: f32[32,128], index: 6, kind: input, shape index: {}]
  %s7 = inlined_call_operand.vmem [shape: f32[4,128], index: 7, kind: input, shape index: {}]
  %s8 = inlined_call_operand.hbm [shape: f32[2,8,128], index: 8, kind: output, shape index: {}]
  %s9 = sld [smem:[#allocation0]]
  $region81: #{tpu_custom_call.1} parent=0
    _
  %s11 = ssub.s32 1, %s9
  %s12 = scalar_select 0, %s11, %s9
  $region1: #{tpu_custom_call.1} parent=0
    #allocation2 [shape = 'u8[4096]{0}', space=vmem, size = 0x1000, scoped, tag = 'input window, operand 2']
    #allocation3 [shape = 's32[2]{0}', space=sflag, size = 0x8, scoped, tag = 'scoped memory for tpu_custom_call.1']
    #allocation4 [shape = 's32[2]{0}', space=sflag, size = 0x8, scoped, tag = 'scoped memory for tpu_custom_call.1']
    #allocation5 [shape = 'u8[4096]{0}', space=vmem, size = 0x1000, scoped, tag = 'input window, operand 4']
    #allocation6 [shape = 's32[2]{0}', space=sflag, size = 0x8, scoped, tag = 'scoped memory for tpu_custom_call.1']
    #allocation7 [shape = 'u8[4096]{0}', space=vmem, size = 0x1000, scoped, tag = 'input window, operand 5']
    #allocation8 [shape = 'u8[16384]{0}', space=vmem, size = 0x4000, scoped, tag = 'input window, operand 6, single buffered']
    #allocation9 [shape = 's32[1]{0}', space=sflag, size = 0x4, scoped, tag = 'scoped memory for tpu_custom_call.1']
    #allocation10 [shape = 'u8[8192]{0}', space=vmem, size = 0x2000, scoped, tag = 'output window, operand 0']
    %13 = vsyncpa [#allocation3], 0
    %s14 = scalar_lea.sflag [#allocation3], 1
    %15 = vsyncpa %s14, 0
    %16 = vsyncpa [#allocation6], 0
    %s17 = scalar_lea.sflag [#allocation6], 1
    %18 = vsyncpa %s17, 0
    %19 = vsyncpa [#allocation9], 0
    %20 = vsyncpa [#allocation4], 0
    %s21 = scalar_lea.sflag [#allocation4], 1
    %22 = vsyncpa %s21, 0
    loop: start=0, step=1, limit=4
    $region2: #{tpu_custom_call.1} parent=1 // loop_pre_header
      _
    $region3: #{tpu_custom_call.1} parent=1 // loop_header
      %s24 = sphi 0, %s28
      %p25 = scmp.ge.s32.totalorder %s24, 4
      %s31 = sphi 0, %s43
      %s32 = sphi 0, %s39
      %s33 = sphi 0, %s31
      %s34 = sphi 0, %s32
      %s35 = sphi 0, %s33
      %s36 = sphi 0, %s34
      %s44 = sphi 0, %s44
      %s46 = sphi 0, %s44
      %s47 = sphi 0, %s46
      %s61 = sphi 0, %s47
      %s67 = sphi 0, %s69
      %s70 = sphi 0, %s67
      %s71 = sphi 0, %s70
      %s87 = sphi 0, %s71
      %s95 = sphi 0, %s97
      %s98 = sphi 0, %s95
      %s99 = sphi 0, %s98
      %s115 = sphi 0, %s99
      %s123 = sphi 0, %s125
      %s126 = sphi 0, %s123
      %s127 = sphi 0, %s126
      %s143 = sphi 0, %s127
      %s151 = sphi 0, %s153
      %s154 = sphi 0, %s151
      %s155 = sphi 0, %s154
      %s171 = sphi 0, %s155
      %s179 = sphi 0, %s181
      %s182 = sphi 0, %s179
      %s183 = sphi 0, %s182
      %s199 = sphi 0, %s183
      %s203 = sphi 0, %s203
      %s205 = sphi 0, %s203
      %s206 = sphi 0, %s205
      %s220 = sphi 0, %s206
      %s224 = sphi 0, %s224
      %s226 = sphi 0, %s224
      %s227 = sphi 0, %s226
      %s241 = sphi 0, %s227
      %s249 = sphi 0, %s251
      %s252 = sphi 0, %s249
      %s253 = sphi 0, %s252
      %s269 = sphi 0, %s253
    $region4: #{tpu_custom_call.1} parent=1 // loop_header_branch
      %27 = sbr.rel (%p25) target = $region8
    $region5: #{tpu_custom_call.1} parent=1 // loop_body
      %s29 = ssub.s32 %s24, 1
      %s30 = ssub.s32 %s24, 2
      %s37 = sadd.s32 1, %s32
      %p38 = scmp.ge.s32.totalorder %s37, 1
      %s39 = scalar_select %p38, 0, %s37
      %s40 = sadd.s32 1, %s31
      %s41 = scalar_select %p38, %s40, %s31
      %p42 = scmp.ge.s32.totalorder %s41, 2
      %s43 = scalar_select %p42, 0, %s41
      %s45 = sadd.s32 %s44, 1
      %p48 = scmp.eq.s32.totalorder %s24, 1
      %p49 = scmp.ne.s32.totalorder %s44, %s46
      %p50 = scmp.eq.s32.totalorder %s24, 0
      %p51 = por %p49, %p50
      %p52 = scmp.ne.s32.totalorder %s44, %s46
      %p53 = scmp.eq.s32.totalorder %s29, 1
      %p54 = por %p52, %p53
      %p55 = scmp.ne.s32.totalorder %s46, %s47
      %p56 = scmp.eq.s32.totalorder %s29, 0
      %p57 = por %p55, %p56
      %p58 = scmp.ne.s32.totalorder %s46, %s47
      %p59 = scmp.eq.s32.totalorder %s30, 1
      %p60 = por %p58, %p59
      %p62 = scmp.ne.s32.totalorder %s47, %s61
      %p63 = scmp.eq.s32.totalorder %s30, 0
      %p64 = por %p62, %p63
      %s65 = ssub.s32 %s31, %s43
      %p66 = scmp.eq.s32.totalorder %s65, 0
      %s68 = sadd.s32 %s67, 1
      %s69 = scalar_select %p66, %s67, %s68
      %p72 = pneg %p66
      %p73 = scmp.eq.s32.totalorder %s24, 1
      %p74 = por %p72, %p73
      %p75 = scmp.ne.s32.totalorder %s67, %s70
      %p76 = scmp.eq.s32.totalorder %s24, 0
      %p77 = por %p75, %p76
      %p78 = scmp.ne.s32.totalorder %s67, %s70
      %p79 = scmp.eq.s32.totalorder %s29, 1
      %p80 = por %p78, %p79
      %p81 = scmp.ne.s32.totalorder %s70, %s71
      %p82 = scmp.eq.s32.totalorder %s29, 0
      %p83 = por %p81, %p82
      %p84 = scmp.ne.s32.totalorder %s70, %s71
      %p85 = scmp.eq.s32.totalorder %s30, 1
      %p86 = por %p84, %p85
      %p88 = scmp.ne.s32.totalorder %s71, %s87
      %p89 = scmp.eq.s32.totalorder %s30, 0
      %p90 = por %p88, %p89
      %s91 = ssub.s32 %s31, %s43
      %s92 = ssub.s32 %s32, %s39
      %s93 = sor.u32 %s91, %s92
      %p94 = scmp.eq.s32.totalorder %s93, 0
      %s96 = sadd.s32 %s95, 1
      %s97 = scalar_select %p94, %s95, %s96
      %p100 = pneg %p94
      %p101 = scmp.eq.s32.totalorder %s24, 1
      %p102 = por %p100, %p101
      %p103 = scmp.ne.s32.totalorder %s95, %s98
      %p104 = scmp.eq.s32.totalorder %s24, 0
      %p105 = por %p103, %p104
      %p106 = scmp.ne.s32.totalorder %s95, %s98
      %p107 = scmp.eq.s32.totalorder %s29, 1
      %p108 = por %p106, %p107
      %p109 = scmp.ne.s32.totalorder %s98, %s99
      %p110 = scmp.eq.s32.totalorder %s29, 0
      %p111 = por %p109, %p110
      %p112 = scmp.ne.s32.totalorder %s98, %s99
      %p113 = scmp.eq.s32.totalorder %s30, 1
      %p114 = por %p112, %p113
      %p116 = scmp.ne.s32.totalorder %s99, %s115
      %p117 = scmp.eq.s32.totalorder %s30, 0
      %p118 = por %p116, %p117
      %s119 = ssub.s32 %s31, %s43
      %s120 = ssub.s32 %s32, %s39
      %s121 = sor.u32 %s119, %s120
      %p122 = scmp.eq.s32.totalorder %s121, 0
      %s124 = sadd.s32 %s123, 1
      %s125 = scalar_select %p122, %s123, %s124
      %p128 = pneg %p122
      %p129 = scmp.eq.s32.totalorder %s24, 1
      %p130 = por %p128, %p129
      %p131 = scmp.ne.s32.totalorder %s123, %s126
      %p132 = scmp.eq.s32.totalorder %s24, 0
      %p133 = por %p131, %p132
      %p134 = scmp.ne.s32.totalorder %s123, %s126
      %p135 = scmp.eq.s32.totalorder %s29, 1
      %p136 = por %p134, %p135
      %p137 = scmp.ne.s32.totalorder %s126, %s127
      %p138 = scmp.eq.s32.totalorder %s29, 0
      %p139 = por %p137, %p138
      %p140 = scmp.ne.s32.totalorder %s126, %s127
      %p141 = scmp.eq.s32.totalorder %s30, 1
      %p142 = por %p140, %p141
      %p144 = scmp.ne.s32.totalorder %s127, %s143
      %p145 = scmp.eq.s32.totalorder %s30, 0
      %p146 = por %p144, %p145
      %s147 = ssub.s32 %s31, %s43
      %s148 = ssub.s32 %s32, %s39
      %s149 = sor.u32 %s147, %s148
      %p150 = scmp.eq.s32.totalorder %s149, 0
      %s152 = sadd.s32 %s151, 1
      %s153 = scalar_select %p150, %s151, %s152
      %p156 = pneg %p150
      %p157 = scmp.eq.s32.totalorder %s24, 1
      %p158 = por %p156, %p157
      %p159 = scmp.ne.s32.totalorder %s151, %s154
      %p160 = scmp.eq.s32.totalorder %s24, 0
      %p161 = por %p159, %p160
      %p162 = scmp.ne.s32.totalorder %s151, %s154
      %p163 = scmp.eq.s32.totalorder %s29, 1
      %p164 = por %p162, %p163
      %p165 = scmp.ne.s32.totalorder %s154, %s155
      %p166 = scmp.eq.s32.totalorder %s29, 0
      %p167 = por %p165, %p166
      %p168 = scmp.ne.s32.totalorder %s154, %s155
      %p169 = scmp.eq.s32.totalorder %s30, 1
      %p170 = por %p168, %p169
      %p172 = scmp.ne.s32.totalorder %s155, %s171
      %p173 = scmp.eq.s32.totalorder %s30, 0
      %p174 = por %p172, %p173
      %s175 = ssub.s32 %s31, %s43
      %s176 = ssub.s32 %s32, %s39
      %s177 = sor.u32 %s175, %s176
      %p178 = scmp.eq.s32.totalorder %s177, 0
      %s180 = sadd.s32 %s179, 1
      %s181 = scalar_select %p178, %s179, %s180
      %p184 = pneg %p178
      %p185 = scmp.eq.s32.totalorder %s24, 1
      %p186 = por %p184, %p185
      %p187 = scmp.ne.s32.totalorder %s179, %s182
      %p188 = scmp.eq.s32.totalorder %s24, 0
      %p189 = por %p187, %p188
      %p190 = scmp.ne.s32.totalorder %s179, %s182
      %p191 = scmp.eq.s32.totalorder %s29, 1
      %p192 = por %p190, %p191
      %p193 = scmp.ne.s32.totalorder %s182, %s183
      %p194 = scmp.eq.s32.totalorder %s29, 0
      %p195 = por %p193, %p194
      %p196 = scmp.ne.s32.totalorder %s182, %s183
      %p197 = scmp.eq.s32.totalorder %s30, 1
      %p198 = por %p196, %p197
      %p200 = scmp.ne.s32.totalorder %s183, %s199
      %p201 = scmp.eq.s32.totalorder %s30, 0
      %p202 = por %p200, %p201
      %s204 = sadd.s32 %s203, 1
      %p207 = scmp.eq.s32.totalorder %s24, 1
      %p208 = scmp.ne.s32.totalorder %s203, %s205
      %p209 = scmp.eq.s32.totalorder %s24, 0
      %p210 = por %p208, %p209
      %p211 = scmp.ne.s32.totalorder %s203, %s205
      %p212 = scmp.eq.s32.totalorder %s29, 1
      %p213 = por %p211, %p212
      %p214 = scmp.ne.s32.totalorder %s205, %s206
      %p215 = scmp.eq.s32.totalorder %s29, 0
      %p216 = por %p214, %p215
      %p217 = scmp.ne.s32.totalorder %s205, %s206
      %p218 = scmp.eq.s32.totalorder %s30, 1
      %p219 = por %p217, %p218
      %p221 = scmp.ne.s32.totalorder %s206, %s220
      %p222 = scmp.eq.s32.totalorder %s30, 0
      %p223 = por %p221, %p222
      %s225 = sadd.s32 %s224, 1
      %p228 = scmp.eq.s32.totalorder %s24, 1
      %p229 = scmp.ne.s32.totalorder %s224, %s226
      %p230 = scmp.eq.s32.totalorder %s24, 0
      %p231 = por %p229, %p230
      %p232 = scmp.ne.s32.totalorder %s224, %s226
      %p233 = scmp.eq.s32.totalorder %s29, 1
      %p234 = por %p232, %p233
      %p235 = scmp.ne.s32.totalorder %s226, %s227
      %p236 = scmp.eq.s32.totalorder %s29, 0
      %p237 = por %p235, %p236
      %p238 = scmp.ne.s32.totalorder %s226, %s227
      %p239 = scmp.eq.s32.totalorder %s30, 1
      %p240 = por %p238, %p239
      %p242 = scmp.ne.s32.totalorder %s227, %s241
      %p243 = scmp.eq.s32.totalorder %s30, 0
      %p244 = por %p242, %p243
      %s245 = ssub.s32 %s31, %s43
      %s246 = ssub.s32 %s32, %s39
      %s247 = sor.u32 %s245, %s246
      %p248 = scmp.eq.s32.totalorder %s247, 0
      %s250 = sadd.s32 %s249, 1
      %s251 = scalar_select %p248, %s249, %s250
      %p254 = pneg %p248
      %p255 = scmp.eq.s32.totalorder %s24, 1
      %p256 = por %p254, %p255
      %p257 = scmp.ne.s32.totalorder %s249, %s252
      %p258 = scmp.eq.s32.totalorder %s24, 0
      %p259 = por %p257, %p258
      %p260 = scmp.ne.s32.totalorder %s249, %s252
      %p261 = scmp.eq.s32.totalorder %s29, 1
      %p262 = por %p260, %p261
      %p263 = scmp.ne.s32.totalorder %s252, %s253
      %p264 = scmp.eq.s32.totalorder %s29, 0
      %p265 = por %p263, %p264
      %p266 = scmp.ne.s32.totalorder %s252, %s253
      %p267 = scmp.eq.s32.totalorder %s30, 1
      %p268 = por %p266, %p267
      %p270 = scmp.ne.s32.totalorder %s253, %s269
      %p271 = scmp.eq.s32.totalorder %s30, 0
      %p272 = por %p270, %p271
      %p273 = scmp.le.s32.totalorder 1, %s24
      %p274 = scmp.lt.s32.totalorder %s24, 3
      %p275 = pnand %p273, %p274
      %p276 = pneg %p275
      // Predicated region
      $region9: #{tpu_custom_call.1} parent=5 // pred_check
        _
      $region10: #{tpu_custom_call.1} parent=5 // pred_check_branch
        %278 = sbr.rel (%p275) target = $region12
      $region11: #{tpu_custom_call.1} parent=5 // pred_region
        %s279 = ssub.s32 %s24, 1
        // Predicated region
        $region13: #{tpu_custom_call.1} parent=11 // pred_check
          %p280 = pneg %p57
        $region14: #{tpu_custom_call.1} parent=11 // pred_check_branch
          %282 = sbr.rel (%p280) target = $region16
        $region15: #{tpu_custom_call.1} parent=11 // pred_region
          _
        $region16: #{tpu_custom_call.1} parent=11 // pred_fallthru
          _
        // Predicated region
        $region17: #{tpu_custom_call.1} parent=11 // pred_check
          %p283 = pneg %p216
        $region18: #{tpu_custom_call.1} parent=11 // pred_check_branch
          %285 = sbr.rel (%p283) target = $region20
        $region19: #{tpu_custom_call.1} parent=11 // pred_region
          %s287 = ssub.s32 512, 512
          %288 = vsyncadd [#allocation9], %s287
          %s289 = sshll.u32 [#allocation8], 4
          %s290 = int_to_ptr.vmem [resolvable:$true] %s289
          %295 = dma.hbm_to_vmem [thread:$0]  %s6, 512, %s290, [#allocation9], 128, 128, 8
        $region20: #{tpu_custom_call.1} parent=11 // pred_fallthru
          _
        // Predicated region
        $region21: #{tpu_custom_call.1} parent=11 // pred_check
          %p296 = pneg %p237
        $region22: #{tpu_custom_call.1} parent=11 // pred_check_branch
          %298 = sbr.rel (%p296) target = $region24
        $region23: #{tpu_custom_call.1} parent=11 // pred_region
          _
        $region24: #{tpu_custom_call.1} parent=11 // pred_fallthru
          _
      $region12: #{tpu_custom_call.1} parent=5 // pred_fallthru
        _
      %p299 = scmp.lt.s32.totalorder %s24, 2
      // Predicated region
      $region25: #{tpu_custom_call.1} parent=5 // pred_check
        %p300 = pneg %p299
      $region26: #{tpu_custom_call.1} parent=5 // pred_check_branch
        %302 = sbr.rel (%p300) target = $region28
      $region27: #{tpu_custom_call.1} parent=5 // pred_region
        // Predicated region
        $region29: #{tpu_custom_call.1} parent=27 // pred_check
          %p303 = pneg %p77
        $region30: #{tpu_custom_call.1} parent=27 // pred_check_branch
          %305 = sbr.rel (%p303) target = $region32
        $region31: #{tpu_custom_call.1} parent=27 // pred_region
          %p306 = scmp.lt.s32.totalorder %s31, 1
          %s307 = scalar_select %p306, %s31, 1
          %s308 = smul.addr %s307, 8
          %s309 = scalar_lea.vmem %s1, %s308
        $region32: #{tpu_custom_call.1} parent=27 // pred_fallthru
          _
        // Predicated region
        $region33: #{tpu_custom_call.1} parent=27 // pred_check
          %p310 = pneg %p105
        $region34: #{tpu_custom_call.1} parent=27 // pred_check_branch
          %312 = sbr.rel (%p310) target = $region36
        $region35: #{tpu_custom_call.1} parent=27 // pred_region
          %s313 = sand.u32 %s95, 1
          %s314 = scalar_lea.sflag [#allocation3], %s313
          %s315 = sand.u32 %s95, 1
          %s316 = smul.addr %s315, 4
          %s317 = scalar_lea.vmem [#allocation2], %s316
          %s319 = ssub.s32 64, 64
          %320 = vsyncadd %s314, %s319
          %s321 = sadd.s32 %s32, %s31
          %s322 = smul.addr %s321, 64
          %s323 = scalar_lea.hbm %s2, %s322
          %s325 = sshll.u32 %s317, 4
          %s326 = int_to_ptr.vmem [resolvable:$true] %s325
          %328 = dma.hbm_to_vmem [thread:$0]  %s323, 64, %s326, %s314
        $region36: #{tpu_custom_call.1} parent=27 // pred_fallthru
          _
        // Predicated region
        $region37: #{tpu_custom_call.1} parent=27 // pred_check
          %p329 = pneg %p133
        $region38: #{tpu_custom_call.1} parent=27 // pred_check_branch
          %331 = sbr.rel (%p329) target = $region40
        $region39: #{tpu_custom_call.1} parent=27 // pred_region
          %p332 = scmp.lt.s32.totalorder %s31, 1
          %s333 = scalar_select %p332, %s31, 1
          %p334 = scmp.lt.s32.totalorder %s32, 0
          %s335 = scalar_select %p334, %s32, 0
          %s336 = sadd.s32 %s335, %s333
          %s337 = smul.addr %s336, 4
          %s338 = scalar_lea.vmem %s3, %s337
        $region40: #{tpu_custom_call.1} parent=27 // pred_fallthru
          _
        // Predicated region
        $region41: #{tpu_custom_call.1} parent=27 // pred_check
          %p339 = pneg %p161
        $region42: #{tpu_custom_call.1} parent=27 // pred_check_branch
          %341 = sbr.rel (%p339) target = $region44
        $region43: #{tpu_custom_call.1} parent=27 // pred_region
          %s342 = sand.u32 %s24, 1
          %s343 = scalar_lea.sflag [#allocation6], %s342
          %s344 = sand.u32 %s151, 1
          %s345 = smul.addr %s344, 4
          %s346 = scalar_lea.vmem [#allocation5], %s345
          %s348 = ssub.s32 64, 64
          %349 = vsyncadd %s343, %s348
          %s350 = sadd.s32 %s32, %s31
          %s351 = smul.addr %s350, 64
          %s352 = scalar_lea.hbm %s4, %s351
          %s354 = sshll.u32 %s346, 4
          %s355 = int_to_ptr.vmem [resolvable:$true] %s354
          %357 = dma.hbm_to_vmem [thread:$0]  %s352, 64, %s355, %s343
        $region44: #{tpu_custom_call.1} parent=27 // pred_fallthru
          _
        // Predicated region
        $region45: #{tpu_custom_call.1} parent=27 // pred_check
          %p358 = pneg %p189
        $region46: #{tpu_custom_call.1} parent=27 // pred_check_branch
          %360 = sbr.rel (%p358) target = $region48
        $region47: #{tpu_custom_call.1} parent=27 // pred_region
          %s361 = sand.u32 %s24, 1
          %s362 = scalar_lea.sflag [#allocation6], %s361
          %s363 = sand.u32 %s179, 1
          %s364 = smul.addr %s363, 4
          %s365 = scalar_lea.vmem [#allocation7], %s364
          %s367 = ssub.s32 64, 64
          %368 = vsyncadd %s362, %s367
          %s369 = sadd.s32 %s32, %s31
          %s370 = smul.addr %s369, 64
          %s371 = scalar_lea.hbm %s5, %s370
          %s373 = sshll.u32 %s365, 4
          %s374 = int_to_ptr.vmem [resolvable:$true] %s373
          %376 = dma.hbm_to_vmem [thread:$0]  %s371, 64, %s374, %s362
        $region48: #{tpu_custom_call.1} parent=27 // pred_fallthru
          _
      $region28: #{tpu_custom_call.1} parent=5 // pred_fallthru
        _
      %p377 = scmp.le.s32.totalorder 1, %s24
      %p378 = scmp.lt.s32.totalorder %s24, 3
      %p379 = pnand %p377, %p378
      %p380 = pneg %p379
      // Predicated region
      $region49: #{tpu_custom_call.1} parent=5 // pred_check
        _
      $region50: #{tpu_custom_call.1} parent=5 // pred_check_branch
        %382 = sbr.rel (%p379) target = $region52
      $region51: #{tpu_custom_call.1} parent=5 // pred_region
        %s383 = ssub.s32 %s24, 1
        %s384 = sand.u32 %s98, 1
        %s385 = scalar_lea.sflag [#allocation3], %s384
        %s386 = sand.u32 %s98, 1
        %s387 = smul.addr %s386, 4
        %s388 = scalar_lea.vmem [#allocation2], %s387
        // Predicated region
        $region53: #{tpu_custom_call.1} parent=51 // pred_check
          %p389 = pneg %p111
        $region54: #{tpu_custom_call.1} parent=51 // pred_check_branch
          %391 = sbr.rel (%p389) target = $region56
        $region55: #{tpu_custom_call.1} parent=51 // pred_region
          %392 = dma.done %s385, 64
        $region56: #{tpu_custom_call.1} parent=51 // pred_fallthru
          _
        %s393 = sand.u32 %s29, 1
        %s394 = scalar_lea.sflag [#allocation6], %s393
        %s395 = sand.u32 %s154, 1
        %s396 = smul.addr %s395, 4
        %s397 = scalar_lea.vmem [#allocation5], %s396
        // Predicated region
        $region57: #{tpu_custom_call.1} parent=51 // pred_check
          %p398 = pneg %p167
        $region58: #{tpu_custom_call.1} parent=51 // pred_check_branch
          %400 = sbr.rel (%p398) target = $region60
        $region59: #{tpu_custom_call.1} parent=51 // pred_region
          %401 = dma.done %s394, 64
        $region60: #{tpu_custom_call.1} parent=51 // pred_fallthru
          _
        %s402 = sand.u32 %s29, 1
        %s403 = scalar_lea.sflag [#allocation6], %s402
        %s404 = sand.u32 %s182, 1
        %s405 = smul.addr %s404, 4
        %s406 = scalar_lea.vmem [#allocation7], %s405
        // Predicated region
        $region61: #{tpu_custom_call.1} parent=51 // pred_check
          %p407 = pneg %p195
        $region62: #{tpu_custom_call.1} parent=51 // pred_check_branch
          %409 = sbr.rel (%p407) target = $region64
        $region63: #{tpu_custom_call.1} parent=51 // pred_region
          %410 = dma.done %s403, 64
        $region64: #{tpu_custom_call.1} parent=51 // pred_fallthru
          _
        // Predicated region
        $region65: #{tpu_custom_call.1} parent=51 // pred_check
          %p411 = pneg %p216
        $region66: #{tpu_custom_call.1} parent=51 // pred_check_branch
          %413 = sbr.rel (%p411) target = $region68
        $region67: #{tpu_custom_call.1} parent=51 // pred_region
          %414 = dma.done [#allocation9], 512
        $region68: #{tpu_custom_call.1} parent=51 // pred_fallthru
          _
        %p415 = pneg %p57
        %p416 = pneg %p54
        %p417 = scmp.lt.s32.totalorder %s33, 1
        %s418 = scalar_select %p417, %s33, 1
        %s419 = smul.addr %s418, 8
        %s420 = scalar_lea.vmem %s1, %s419
        %p421 = pneg %p83
        %p422 = pneg %p80
        %s423 = sand.u32 %s98, 1
        %s424 = scalar_lea.sflag [#allocation3], %s423
        %s425 = sand.u32 %s98, 1
        %s426 = smul.addr %s425, 4
        %s427 = scalar_lea.vmem [#allocation2], %s426
        %p428 = pneg %p111
        %p429 = pneg %p108
        %p430 = scmp.lt.s32.totalorder %s33, 1
        %s431 = scalar_select %p430, %s33, 1
        %p432 = scmp.lt.s32.totalorder %s34, 0
        %s433 = scalar_select %p432, %s34, 0
        %s434 = sadd.s32 %s433, %s431
        %s435 = smul.addr %s434, 4
        %s436 = scalar_lea.vmem %s3, %s435
        %p437 = pneg %p139
        %p438 = pneg %p136
        %s439 = sand.u32 %s29, 1
        %s440 = scalar_lea.sflag [#allocation6], %s439
        %s441 = sand.u32 %s154, 1
        %s442 = smul.addr %s441, 4
        %s443 = scalar_lea.vmem [#allocation5], %s442
        %p444 = pneg %p167
        %p445 = pneg %p164
        %s446 = sand.u32 %s29, 1
        %s447 = scalar_lea.sflag [#allocation6], %s446
        %s448 = sand.u32 %s182, 1
        %s449 = smul.addr %s448, 4
        %s450 = scalar_lea.vmem [#allocation7], %s449
        %p451 = pneg %p195
        %p452 = pneg %p192
        %p453 = pneg %p216
        %p454 = pneg %p213
        %p455 = pneg %p237
        %p456 = pneg %p234
        %p457 = pneg %p265
        %p458 = pneg %p262
        %s459 = sand.u32 %s252, 1
        %s460 = scalar_lea.sflag [#allocation4], %s459
        %s461 = sand.u32 %s252, 1
        %s462 = smul.addr %s461, 8
        %s463 = scalar_lea.vmem [#allocation10], %s462
        %p464 = scmp.lt.s32.totalorder %s33, 1
        %s465 = scalar_select %p464, %s33, 1
        %s466 = smul.addr %s465, 8
        %s467 = scalar_lea.vmem %s1, %s466
        %p468 = scmp.lt.s32.totalorder %s33, 1
        %s469 = scalar_select %p468, %s33, 1
        %p470 = scmp.lt.s32.totalorder %s34, 0
        %s471 = scalar_select %p470, %s34, 0
        %s472 = sadd.s32 %s471, %s469
        %s473 = smul.addr %s472, 4
        %s474 = scalar_lea.vmem %s3, %s473
        %v475 = vld [vmem:[%s467] sm:$0xff]
        %v476 = vld [vmem:[%s388] sm:$0xf]
        %v477 = vld [vmem:[%s474] sm:$0xf]
        %v478 = vld [vmem:[%s397] sm:$0xf]
        %v479 = vld [vmem:[%s406] sm:$0xf]
        %v480 = vld [vmem:[%s0] sm:$0xf]
        %v481 = vld [vmem:[%s0 + $0x4] sm:$0xf]
        %v482 = vld [vmem:[%s0 + $0x8] sm:$0xf]
        %v483 = vld [vmem:[%s0 + $0xc] sm:$0xf]
        %v484 = vld [vmem:[%s7] sm:$0xf]
        %v487 = vunpack.c.l.s4 1966171168
        %v488 = vunpack.c.0.s8 %v487
        %v489 = vlaneseq
        %v490 = vshrl.u32 %v489, 7
        %v491 = vsub.s32 %v488, %v490
        %v492 = vrot.slane %v476, %v491
        %v493 = vcombine.high %v492, %v492
        %v495 = vunpack.c.l.s4 1966171168
        %v496 = vunpack.c.0.s8 %v495
        %v497 = vlaneseq
        %v498 = vshrl.u32 %v497, 7
        %v499 = vsub.s32 %v496, %v498
        %v500 = vrot.slane %v492, %v499
        %v502 = vunpack.c.l.s4 1966171168
        %v503 = vunpack.c.0.s8 %v502
        %v504 = vlaneseq
        %v505 = vshrl.u32 %v504, 7
        %v506 = vsub.s32 %v503, %v505
        %v507 = vrot.slane %v493, %v506
        %v508 = vcombine.high %v500, %v500
        %v509 = vcombine.high %v507, %v507
        %v510 = vlaneseq
        %v511 = vshrl.u32 %v510, 7
        %v512 = vsub.s32 0, %v511
        %v513 = vrot.slane %v500, %v512
        %v514 = vlaneseq
        %v515 = vshrl.u32 %v514, 7
        %v516 = vsub.s32 0, %v515
        %v517 = vrot.slane %v507, %v516
        %v518 = vlaneseq
        %v519 = vshrl.u32 %v518, 7
        %v520 = vsub.s32 0, %v519
        %v521 = vrot.slane %v508, %v520
        %v522 = vlaneseq
        %v523 = vshrl.u32 %v522, 7
        %v524 = vsub.s32 0, %v523
        %v525 = vrot.slane %v509, %v524
        %531 = vset.pattern.permute.xlu0 0
        %532 = vperm.xlu0 %531, %v480
        %v533 = vpop.permute.xlu0 %532
        %v535 = vsub.f32 %v513, %v533
        %v536 = vsub.f32 %v517, %v533
        %v537 = vsub.f32 %v521, %v533
        %v538 = vsub.f32 %v525, %v533
        %540 = vset.pattern.permute.xlu0 0
        %541 = vperm.xlu0 %540, %v482
        %v542 = vpop.permute.xlu0 %541
        %v544 = vmul.f32 %v542, %v535
        %v545 = vmul.f32 %v542, %v536
        %v546 = vmul.f32 %v542, %v537
        %v547 = vmul.f32 %v542, %v538
        %v548 = vmul.f32 %v544, %v535
        %v549 = vmul.f32 %v545, %v536
        %v550 = vmul.f32 %v546, %v537
        %v551 = vmul.f32 %v547, %v538
        %v552 = vmul.f32 %v548, 1.442695
        %v553 = vpow.pop %v552
        %v554 = vmul.f32 %v549, 1.442695
        %v555 = vpow.pop %v554
        %v556 = vmul.f32 %v550, 1.442695
        %v557 = vpow.pop %v556
        %v558 = vmul.f32 %v551, 1.442695
        %v559 = vpow.pop %v558
        %v562 = vunpack.c.l.s4 1966171168
        %v563 = vunpack.c.0.s8 %v562
        %v564 = vlaneseq
        %v565 = vshrl.u32 %v564, 7
        %v566 = vsub.s32 %v563, %v565
        %v567 = vrot.slane %v477, %v566
        %v568 = vcombine.high %v567, %v567
        %v570 = vunpack.c.l.s4 1966171168
        %v571 = vunpack.c.0.s8 %v570
        %v572 = vlaneseq
        %v573 = vshrl.u32 %v572, 7
        %v574 = vsub.s32 %v571, %v573
        %v575 = vrot.slane %v567, %v574
        %v577 = vunpack.c.l.s4 1966171168
        %v578 = vunpack.c.0.s8 %v577
        %v579 = vlaneseq
        %v580 = vshrl.u32 %v579, 7
        %v581 = vsub.s32 %v578, %v580
        %v582 = vrot.slane %v568, %v581
        %v583 = vcombine.high %v575, %v575
        %v584 = vcombine.high %v582, %v582
        %v585 = vlaneseq
        %v586 = vshrl.u32 %v585, 7
        %v587 = vsub.s32 0, %v586
        %v588 = vrot.slane %v575, %v587
        %v589 = vlaneseq
        %v590 = vshrl.u32 %v589, 7
        %v591 = vsub.s32 0, %v590
        %v592 = vrot.slane %v582, %v591
        %v593 = vlaneseq
        %v594 = vshrl.u32 %v593, 7
        %v595 = vsub.s32 0, %v594
        %v596 = vrot.slane %v583, %v595
        %v597 = vlaneseq
        %v598 = vshrl.u32 %v597, 7
        %v599 = vsub.s32 0, %v598
        %v600 = vrot.slane %v584, %v599
        %606 = vset.pattern.permute.xlu0 0
        %607 = vperm.xlu0 %606, %v481
        %v608 = vpop.permute.xlu0 %607
        %v610 = vsub.f32 %v588, %v608
        %v611 = vsub.f32 %v592, %v608
        %v612 = vsub.f32 %v596, %v608
        %v613 = vsub.f32 %v600, %v608
        %v614 = vand.u32 2147483647, %v610
        %v615 = vand.u32 2147483647, %v611
        %v616 = vand.u32 2147483647, %v612
        %v617 = vand.u32 2147483647, %v613
        %v618 = vsub.f32 6.2831855, %v614
        %v619 = vsub.f32 6.2831855, %v615
        %v620 = vsub.f32 6.2831855, %v616
        %v621 = vsub.f32 6.2831855, %v617
        %v622 = vand.u32 2147483647, %v618
        %v623 = vand.u32 2147483647, %v619
        %v624 = vand.u32 2147483647, %v620
        %v625 = vand.u32 2147483647, %v621
        %v626 = vmin.f32 %v614, %v622
        %v627 = vmin.f32 %v615, %v623
        %v628 = vmin.f32 %v616, %v624
        %v629 = vmin.f32 %v617, %v625
        %631 = vset.pattern.permute.xlu0 0
        %632 = vperm.xlu0 %631, %v483
        %v633 = vpop.permute.xlu0 %632
        %v635 = vmul.f32 %v633, %v626
        %v636 = vmul.f32 %v633, %v627
        %v637 = vmul.f32 %v633, %v628
        %v638 = vmul.f32 %v633, %v629
        %v639 = vmul.f32 %v635, %v626
        %v640 = vmul.f32 %v636, %v627
        %v641 = vmul.f32 %v637, %v628
        %v642 = vmul.f32 %v638, %v629
        %v643 = vmul.f32 %v639, 1.442695
        %v644 = vpow.pop %v643
        %v645 = vmul.f32 %v640, 1.442695
        %v646 = vpow.pop %v645
        %v647 = vmul.f32 %v641, 1.442695
        %v648 = vpow.pop %v647
        %v649 = vmul.f32 %v642, 1.442695
        %v650 = vpow.pop %v649
        %v651 = vmul.f32 %v553, %v644
        %v652 = vmul.f32 %v555, %v646
        %v653 = vmul.f32 %v557, %v648
        %v654 = vmul.f32 %v559, %v650
        %vm655 = vcmp.ne.f32.partialorder %v476, %v476
        %vm656 = vcmp.ne.f32.partialorder %v477, %v477
        %vm657 = vmor %vm655, %vm656
        %v658 = vsel %vm657, 1, 0
        %v660 = vunpack.c.l.s4 1966171168
        %v661 = vunpack.c.0.s8 %v660
        %v662 = vlaneseq
        %v663 = vshrl.u32 %v662, 7
        %v664 = vsub.s32 %v661, %v663
        %v665 = vrot.slane %v658, %v664
        %v666 = vcombine.high %v665, %v665
        %v668 = vunpack.c.l.s4 1966171168
        %v669 = vunpack.c.0.s8 %v668
        %v670 = vlaneseq
        %v671 = vshrl.u32 %v670, 7
        %v672 = vsub.s32 %v669, %v671
        %v673 = vrot.slane %v665, %v672
        %v675 = vunpack.c.l.s4 1966171168
        %v676 = vunpack.c.0.s8 %v675
        %v677 = vlaneseq
        %v678 = vshrl.u32 %v677, 7
        %v679 = vsub.s32 %v676, %v678
        %v680 = vrot.slane %v666, %v679
        %v681 = vcombine.high %v673, %v673
        %v682 = vcombine.high %v680, %v680
        %vm683 = vcmp.ne.s32.totalorder %v673, 0
        %vm684 = vcmp.ne.s32.totalorder %v680, 0
        %vm685 = vcmp.ne.s32.totalorder %v681, 0
        %vm686 = vcmp.ne.s32.totalorder %v682, 0
        %v687 = vsel %vm683, 1, 0
        %v688 = vsel %vm684, 1, 0
        %v689 = vsel %vm685, 1, 0
        %v690 = vsel %vm686, 1, 0
        %v691 = vlaneseq
        %v692 = vshrl.u32 %v691, 7
        %v693 = vsub.s32 0, %v692
        %v694 = vrot.slane %v687, %v693
        %v695 = vlaneseq
        %v696 = vshrl.u32 %v695, 7
        %v697 = vsub.s32 0, %v696
        %v698 = vrot.slane %v688, %v697
        %v699 = vlaneseq
        %v700 = vshrl.u32 %v699, 7
        %v701 = vsub.s32 0, %v700
        %v702 = vrot.slane %v689, %v701
        %v703 = vlaneseq
        %v704 = vshrl.u32 %v703, 7
        %v705 = vsub.s32 0, %v704
        %v706 = vrot.slane %v690, %v705
        %vm707 = vcmp.eq.s32.totalorder %v694, 1
        %vm708 = vcmp.eq.s32.totalorder %v698, 1
        %vm709 = vcmp.eq.s32.totalorder %v702, 1
        %vm710 = vcmp.eq.s32.totalorder %v706, 1
        %v711 = vsel %vm707, 0.0, %v651
        %v712 = vsel %vm708, 0.0, %v652
        %v713 = vsel %vm709, 0.0, %v653
        %v714 = vsel %vm710, 0.0, %v654
        %vm715 = vcmask 60416
        %v716 = vsel %vm715, %v711, 0.0
        %v717 = vrot.slane %v716, 4
        %v718 = vadd.f32 %v716, %v717
        %v719 = vrot.slane %v718, 2
        %v720 = vadd.f32 %v718, %v719
        %v721 = vrot.slane %v720, 1
        %v722 = vadd.f32 %v720, %v721
        %v723 = vsel %vm715, %v712, 0.0
        %v724 = vrot.slane %v723, 4
        %v725 = vadd.f32 %v723, %v724
        %v726 = vrot.slane %v725, 2
        %v727 = vadd.f32 %v725, %v726
        %v728 = vrot.slane %v727, 1
        %v729 = vadd.f32 %v727, %v728
        %v730 = vsel %vm715, %v713, 0.0
        %v731 = vrot.slane %v730, 4
        %v732 = vadd.f32 %v730, %v731
        %v733 = vrot.slane %v732, 2
        %v734 = vadd.f32 %v732, %v733
        %v735 = vrot.slane %v734, 1
        %v736 = vadd.f32 %v734, %v735
        %v737 = vsel %vm715, %v714, 0.0
        %v738 = vrot.slane %v737, 4
        %v739 = vadd.f32 %v737, %v738
        %v740 = vrot.slane %v739, 2
        %v741 = vadd.f32 %v739, %v740
        %v742 = vrot.slane %v741, 1
        %v743 = vadd.f32 %v741, %v742
        %v744 = vadd.f32 %v722, 1e-14
        %v745 = vadd.f32 %v729, 1e-14
        %v746 = vadd.f32 %v736, 1e-14
        %v747 = vadd.f32 %v743, 1e-14
        %v748 = vrcp.pop %v744
        %v749 = vrcp.pop %v745
        %v750 = vrcp.pop %v746
        %v751 = vrcp.pop %v747
        %v754 = vunpack.c.l.s4 1966171168
        %v755 = vunpack.c.0.s8 %v754
        %v756 = vlaneseq
        %v757 = vshrl.u32 %v756, 7
        %v758 = vsub.s32 %v755, %v757
        %v759 = vrot.slane %v478, %v758
        %v760 = vcombine.high %v759, %v759
        %v762 = vunpack.c.l.s4 1966171168
        %v763 = vunpack.c.0.s8 %v762
        %v764 = vlaneseq
        %v765 = vshrl.u32 %v764, 7
        %v766 = vsub.s32 %v763, %v765
        %v767 = vrot.slane %v759, %v766
        %v769 = vunpack.c.l.s4 1966171168
        %v770 = vunpack.c.0.s8 %v769
        %v771 = vlaneseq
        %v772 = vshrl.u32 %v771, 7
        %v773 = vsub.s32 %v770, %v772
        %v774 = vrot.slane %v760, %v773
        %v775 = vcombine.high %v767, %v767
        %v776 = vcombine.high %v774, %v774
        %v781 = vmul.f32 %v748, %v767
        %v782 = vmul.f32 %v749, %v774
        %v783 = vmul.f32 %v750, %v775
        %v784 = vmul.f32 %v751, %v776
        %v785 = vlaneseq
        %v786 = vshrl.u32 %v785, 7
        %v787 = vsub.s32 0, %v786
        %v788 = vrot.slane %v781, %v787
        %v789 = vlaneseq
        %v790 = vshrl.u32 %v789, 7
        %v791 = vsub.s32 0, %v790
        %v792 = vrot.slane %v782, %v791
        %v793 = vlaneseq
        %v794 = vshrl.u32 %v793, 7
        %v795 = vsub.s32 0, %v794
        %v796 = vrot.slane %v783, %v795
        %v797 = vlaneseq
        %v798 = vshrl.u32 %v797, 7
        %v799 = vsub.s32 0, %v798
        %v800 = vrot.slane %v784, %v799
        %v801 = vmul.f32 %v711, %v788
        %v802 = vmul.f32 %v712, %v792
        %v803 = vmul.f32 %v713, %v796
        %v804 = vmul.f32 %v714, %v800
        %v805 = vlaneseq
        %v806 = vand.u32 %v805, 127
        %v807 = vlaneseq
        %v808 = vshrl.u32 %v807, 7
        %v809 = vsub.s32 0, %v808
        %v810 = vrot.slane %v479, %v809
        %812 = vbcast.lane.b32.xlu0 %v810, 256
        %v813 = vpop.permute.xlu0 %812
        %v814 = vlaneseq
        %v815 = vshrl.u32 %v814, 7
        %v816 = vsub.s32 1, %v815
        %v817 = vrot.slane %v479, %v816
        %819 = vbcast.lane.b32.xlu0 %v817, 256
        %v820 = vpop.permute.xlu0 %819
        %v821 = vlaneseq
        %v822 = vshrl.u32 %v821, 7
        %v823 = vsub.s32 2, %v822
        %v824 = vrot.slane %v479, %v823
        %826 = vbcast.lane.b32.xlu0 %v824, 256
        %v827 = vpop.permute.xlu0 %826
        %v828 = vlaneseq
        %v829 = vshrl.u32 %v828, 7
        %v830 = vsub.s32 3, %v829
        %v831 = vrot.slane %v479, %v830
        %833 = vbcast.lane.b32.xlu0 %v831, 256
        %v834 = vpop.permute.xlu0 %833
        %vm835 = vcmp.eq.s32.totalorder %v813, %v806
        %vm836 = vcmp.eq.s32.totalorder %v820, %v806
        %vm837 = vcmp.eq.s32.totalorder %v827, %v806
        %vm838 = vcmp.eq.s32.totalorder %v834, %v806
        %v839 = vsel %vm835, 1, 0
        %v840 = vsel %vm836, 1, 0
        %v841 = vsel %vm837, 1, 0
        %v842 = vsel %vm838, 1, 0
        %v843 = vcvt.s32.f32 %v839
        %v844 = vcvt.s32.f32 %v840
        %v845 = vcvt.s32.f32 %v841
        %v846 = vcvt.s32.f32 %v842
        %vm847 = vcmask 64512
        %v849 = vsel %vm847, %v843, 0
        %v852 = vsel %vm847, %v844, 0
        %v855 = vsel %vm847, %v845, 0
        %v858 = vsel %vm847, %v846, 0
        %860 = vmatprep.subr.mxu0 0.0
        %861 = vmatpush1.msra.mxu0 0.0
        %862 = vmatprep.subr.mxu0 0.0
        %863 = vmatpush1.msra.mxu0 0.0
        %864 = vmatprep.subr.mxu0 0.0
        %865 = vmatpush1.msra.mxu0 0.0
        %866 = vmatprep.subr.mxu0 0.0
        %867 = vmatpush1.msra.mxu0 0.0
        %868 = vmatprep.subr.mxu0 0.0
        %869 = vmatpush1.msra.mxu0 0.0
        %870 = vmatprep.subr.mxu0 0.0
        %871 = vmatpush1.msra.mxu0 0.0
        %872 = vmatprep.subr.mxu0 0.0
        %873 = vmatpush1.msra.mxu0 0.0
        %874 = vmatprep.subr.mxu0 0.0
        %875 = vmatpush1.msra.mxu0 0.0
        %876 = vmatprep.subr.mxu0 0.0
        %877 = vmatpush1.msra.mxu0 0.0
        %878 = vmatprep.subr.mxu0 0.0
        %879 = vmatpush1.msra.mxu0 0.0
        %880 = vmatprep.subr.mxu0 0.0
        %881 = vmatpush1.msra.mxu0 0.0
        %882 = vmatprep.subr.mxu0 0.0
        %883 = vmatpush1.msra.mxu0 0.0
        %884 = vmatprep.subr.mxu0 0.0
        %885 = vmatpush1.msra.mxu0 0.0
        %886 = vmatprep.subr.mxu0 0.0
        %887 = vmatpush1.msra.mxu0 0.0
        %888 = vmatprep.subr.mxu0 0.0
        %889 = vmatpush1.msra.mxu0 0.0
        %890 = vmatprep.subr.mxu0 0.0
        %891 = vmatpush1.msra.mxu0 %v475
        %892 = vmatprep.subr.mxu0 0.0
        %893 = vmatpush2.msra.mxu0 0.0
        %894 = vmatprep.subr.mxu0 0.0
        %895 = vmatpush2.msra.mxu0 0.0
        %896 = vmatprep.subr.mxu0 0.0
        %897 = vmatpush2.msra.mxu0 0.0
        %898 = vmatprep.subr.mxu0 0.0
        %899 = vmatpush2.msra.mxu0 0.0
        %900 = vmatprep.subr.mxu0 0.0
        %901 = vmatpush2.msra.mxu0 0.0
        %902 = vmatprep.subr.mxu0 0.0
        %903 = vmatpush2.msra.mxu0 0.0
        %904 = vmatprep.subr.mxu0 0.0
        %905 = vmatpush2.msra.mxu0 0.0
        %906 = vmatprep.subr.mxu0 0.0
        %907 = vmatpush2.msra.mxu0 0.0
        %908 = vmatprep.subr.mxu0 0.0
        %909 = vmatpush2.msra.mxu0 0.0
        %910 = vmatprep.subr.mxu0 0.0
        %911 = vmatpush2.msra.mxu0 0.0
        %912 = vmatprep.subr.mxu0 0.0
        %913 = vmatpush2.msra.mxu0 0.0
        %914 = vmatprep.subr.mxu0 0.0
        %915 = vmatpush2.msra.mxu0 0.0
        %916 = vmatprep.subr.mxu0 0.0
        %917 = vmatpush2.msra.mxu0 0.0
        %918 = vmatprep.subr.mxu0 0.0
        %919 = vmatpush2.msra.mxu0 0.0
        %920 = vmatprep.subr.mxu0 0.0
        %921 = vmatpush2.msra.mxu0 0.0
        %922 = vmatprep.subr.mxu0 0.0
        %923 = vmatpush2.msra.mxu0 0.0
        %924 = vmatprep.mubr.f32.mxu0 0.0
        %925 = vmatmul.mubr.f32.gmra.mxu0 %v849
        %v926 = vpop.f32.mrf.mxu0
        %v927 = vadd.f32 0.0, %v926
        %v928 = vpop.f32.mrf.mxu0
        %929 = vmatprep.mubr.f32.mxu0 0.0
        %930 = vmatmul.mubr.f32.gmra.mxu0 %v852
        %v931 = vpop.f32.mrf.mxu0
        %v932 = vadd.f32 0.0, %v931
        %v933 = vpop.f32.mrf.mxu0
        %934 = vmatprep.mubr.f32.mxu0 0.0
        %935 = vmatmul.mubr.f32.gmra.mxu0 %v855
        %v936 = vpop.f32.mrf.mxu0
        %v937 = vadd.f32 0.0, %v936
        %v938 = vpop.f32.mrf.mxu0
        %939 = vmatprep.mubr.f32.mxu0 0.0
        %940 = vmatmul.mubr.f32.gmra.mxu0 %v858
        %v941 = vpop.f32.mrf.mxu0
        %v942 = vadd.f32 0.0, %v941
        %v943 = vpop.f32.mrf.mxu0
        %944 = vdwg.mxu0
        %v945 = vld [vmem:[#allocation8] sm:$0xff]
        %v946 = vld [vmem:[#allocation8 + $0x8] sm:$0xff]
        %v947 = vld [vmem:[#allocation8 + $0x10] sm:$0xff]
        %v948 = vld [vmem:[#allocation8 + $0x18] sm:$0xff]
        %vm949 = vcmask 261120
        %v951 = vsel %vm949, %v927, 0
        %v954 = vsel %vm949, %v932, 0
        %v957 = vsel %vm949, %v937, 0
        %v960 = vsel %vm949, %v942, 0
        %962 = vmatprep.subr.mxu0 0.0
        %963 = vmatpush1.msra.mxu0 0.0
        %964 = vmatprep.subr.mxu0 0.0
        %965 = vmatpush1.msra.mxu0 0.0
        %966 = vmatprep.subr.mxu0 0.0
        %967 = vmatpush1.msra.mxu0 0.0
        %968 = vmatprep.subr.mxu0 0.0
        %969 = vmatpush1.msra.mxu0 0.0
        %970 = vmatprep.subr.mxu0 0.0
        %971 = vmatpush1.msra.mxu0 0.0
        %972 = vmatprep.subr.mxu0 0.0
        %973 = vmatpush1.msra.mxu0 0.0
        %974 = vmatprep.subr.mxu0 0.0
        %975 = vmatpush1.msra.mxu0 0.0
        %976 = vmatprep.subr.mxu0 0.0
        %977 = vmatpush1.msra.mxu0 0.0
        %978 = vmatprep.subr.mxu0 0.0
        %979 = vmatpush1.msra.mxu0 0.0
        %980 = vmatprep.subr.mxu0 0.0
        %981 = vmatpush1.msra.mxu0 0.0
        %982 = vmatprep.subr.mxu0 0.0
        %983 = vmatpush1.msra.mxu0 0.0
        %984 = vmatprep.subr.mxu0 0.0
        %985 = vmatpush1.msra.mxu0 0.0
        %986 = vmatprep.subr.mxu0 0.0
        %987 = vmatpush1.msra.mxu0 %v948
        %988 = vmatprep.subr.mxu0 0.0
        %989 = vmatpush1.msra.mxu0 %v947
        %990 = vmatprep.subr.mxu0 0.0
        %991 = vmatpush1.msra.mxu0 %v946
        %992 = vmatprep.subr.mxu0 0.0
        %993 = vmatpush1.msra.mxu0 %v945
        %994 = vmatprep.subr.mxu0 0.0
        %995 = vmatpush2.msra.mxu0 0.0
        %996 = vmatprep.subr.mxu0 0.0
        %997 = vmatpush2.msra.mxu0 0.0
        %998 = vmatprep.subr.mxu0 0.0
        %999 = vmatpush2.msra.mxu0 0.0
        %1000 = vmatprep.subr.mxu0 0.0
        %1001 = vmatpush2.msra.mxu0 0.0
        %1002 = vmatprep.subr.mxu0 0.0
        %1003 = vmatpush2.msra.mxu0 0.0
        %1004 = vmatprep.subr.mxu0 0.0
        %1005 = vmatpush2.msra.mxu0 0.0
        %1006 = vmatprep.subr.mxu0 0.0
        %1007 = vmatpush2.msra.mxu0 0.0
        %1008 = vmatprep.subr.mxu0 0.0
        %1009 = vmatpush2.msra.mxu0 0.0
        %1010 = vmatprep.subr.mxu0 0.0
        %1011 = vmatpush2.msra.mxu0 0.0
        %1012 = vmatprep.subr.mxu0 0.0
        %1013 = vmatpush2.msra.mxu0 0.0
        %1014 = vmatprep.subr.mxu0 0.0
        %1015 = vmatpush2.msra.mxu0 0.0
        %1016 = vmatprep.subr.mxu0 0.0
        %1017 = vmatpush2.msra.mxu0 0.0
        %1018 = vmatprep.subr.mxu0 0.0
        %1019 = vmatpush2.msra.mxu0 0.0
        %1020 = vmatprep.subr.mxu0 0.0
        %1021 = vmatpush2.msra.mxu0 0.0
        %1022 = vmatprep.subr.mxu0 0.0
        %1023 = vmatpush2.msra.mxu0 0.0
        %1024 = vmatprep.subr.mxu0 0.0
        %1025 = vmatpush2.msra.mxu0 0.0
        %1026 = vmatprep.mubr.f32.mxu0 0.0
        %1027 = vmatmul.mubr.f32.gmra.mxu0 %v951
        %v1028 = vpop.f32.mrf.mxu0
        %v1029 = vadd.f32 0.0, %v1028
        %v1030 = vpop.f32.mrf.mxu0
        %1031 = vmatprep.mubr.f32.mxu0 0.0
        %1032 = vmatmul.mubr.f32.gmra.mxu0 %v954
        %v1033 = vpop.f32.mrf.mxu0
        %v1034 = vadd.f32 0.0, %v1033
        %v1035 = vpop.f32.mrf.mxu0
        %1036 = vmatprep.mubr.f32.mxu0 0.0
        %1037 = vmatmul.mubr.f32.gmra.mxu0 %v957
        %v1038 = vpop.f32.mrf.mxu0
        %v1039 = vadd.f32 0.0, %v1038
        %v1040 = vpop.f32.mrf.mxu0
        %1041 = vmatprep.mubr.f32.mxu0 0.0
        %1042 = vmatmul.mubr.f32.gmra.mxu0 %v960
        %v1043 = vpop.f32.mrf.mxu0
        %v1044 = vadd.f32 0.0, %v1043
        %v1045 = vpop.f32.mrf.mxu0
        %1046 = vdwg.mxu0
        %v1047 = vlaneseq
        %v1048 = vshrl.u32 %v1047, 7
        %v1049 = vsub.s32 0, %v1048
        %v1050 = vrot.slane %v801, %v1049
        %1052 = vbcast.lane.b32.xlu0 %v1050, 256
        %v1053 = vpop.permute.xlu0 %1052
        %v1054 = vlaneseq
        %v1055 = vshrl.u32 %v1054, 7
        %v1056 = vsub.s32 0, %v1055
        %v1057 = vrot.slane %v802, %v1056
        %1059 = vbcast.lane.b32.xlu0 %v1057, 256
        %v1060 = vpop.permute.xlu0 %1059
        %v1061 = vlaneseq
        %v1062 = vshrl.u32 %v1061, 7
        %v1063 = vsub.s32 0, %v1062
        %v1064 = vrot.slane %v803, %v1063
        %1066 = vbcast.lane.b32.xlu0 %v1064, 256
        %v1067 = vpop.permute.xlu0 %1066
        %v1068 = vlaneseq
        %v1069 = vshrl.u32 %v1068, 7
        %v1070 = vsub.s32 0, %v1069
        %v1071 = vrot.slane %v804, %v1070
        %1073 = vbcast.lane.b32.xlu0 %v1071, 256
        %v1074 = vpop.permute.xlu0 %1073
        %v1075 = vmul.f32 %v1053, %v1029
        %v1076 = vmul.f32 %v1060, %v1034
        %v1077 = vmul.f32 %v1067, %v1039
        %v1078 = vmul.f32 %v1074, %v1044
        %v1079 = vadd.f32 %v1075, %v1076
        %v1080 = vadd.f32 %v1079, %v1077
        %v1081 = vadd.f32 %v1080, %v1078
        %v1082 = vlaneseq
        %v1083 = vshrl.u32 %v1082, 7
        %v1084 = vsub.s32 0, %v1083
        %v1085 = vrot.slane %v484, %v1084
        %v1086 = vmul.f32 %v1081, %v1085
        %v1087 = vadd.f32 %v1086, 0.0
        %v1088 = vlaneseq
        %v1089 = vshrl.u32 %v1088, 7
        %v1090 = vsub.s32 1, %v1089
        %v1091 = vrot.slane %v801, %v1090
        %1093 = vbcast.lane.b32.xlu0 %v1091, 256
        %v1094 = vpop.permute.xlu0 %1093
        %v1095 = vlaneseq
        %v1096 = vshrl.u32 %v1095, 7
        %v1097 = vsub.s32 1, %v1096
        %v1098 = vrot.slane %v802, %v1097
        %1100 = vbcast.lane.b32.xlu0 %v1098, 256
        %v1101 = vpop.permute.xlu0 %1100
        %v1102 = vlaneseq
        %v1103 = vshrl.u32 %v1102, 7
        %v1104 = vsub.s32 1, %v1103
        %v1105 = vrot.slane %v803, %v1104
        %1107 = vbcast.lane.b32.xlu0 %v1105, 256
        %v1108 = vpop.permute.xlu0 %1107
        %v1109 = vlaneseq
        %v1110 = vshrl.u32 %v1109, 7
        %v1111 = vsub.s32 1, %v1110
        %v1112 = vrot.slane %v804, %v1111
        %1114 = vbcast.lane.b32.xlu0 %v1112, 256
        %v1115 = vpop.permute.xlu0 %1114
        %v1116 = vmul.f32 %v1094, %v1029
        %v1117 = vmul.f32 %v1101, %v1034
        %v1118 = vmul.f32 %v1108, %v1039
        %v1119 = vmul.f32 %v1115, %v1044
        %v1120 = vadd.f32 %v1116, %v1117
        %v1121 = vadd.f32 %v1120, %v1118
        %v1122 = vadd.f32 %v1121, %v1119
        %v1123 = vlaneseq
        %v1124 = vshrl.u32 %v1123, 7
        %v1125 = vsub.s32 1, %v1124
        %v1126 = vrot.slane %v484, %v1125
        %v1127 = vmul.f32 %v1122, %v1126
        %v1128 = vadd.f32 %v1087, %v1127
        %v1129 = vlaneseq
        %v1130 = vshrl.u32 %v1129, 7
        %v1131 = vsub.s32 2, %v1130
        %v1132 = vrot.slane %v801, %v1131
        %1134 = vbcast.lane.b32.xlu0 %v1132, 256
        %v1135 = vpop.permute.xlu0 %1134
        %v1136 = vlaneseq
        %v1137 = vshrl.u32 %v1136, 7
        %v1138 = vsub.s32 2, %v1137
        %v1139 = vrot.slane %v802, %v1138
        %1141 = vbcast.lane.b32.xlu0 %v1139, 256
        %v1142 = vpop.permute.xlu0 %1141
        %v1143 = vlaneseq
        %v1144 = vshrl.u32 %v1143, 7
        %v1145 = vsub.s32 2, %v1144
        %v1146 = vrot.slane %v803, %v1145
        %1148 = vbcast.lane.b32.xlu0 %v1146, 256
        %v1149 = vpop.permute.xlu0 %1148
        %v1150 = vlaneseq
        %v1151 = vshrl.u32 %v1150, 7
        %v1152 = vsub.s32 2, %v1151
        %v1153 = vrot.slane %v804, %v1152
        %1155 = vbcast.lane.b32.xlu0 %v1153, 256
        %v1156 = vpop.permute.xlu0 %1155
        %v1157 = vmul.f32 %v1135, %v1029
        %v1158 = vmul.f32 %v1142, %v1034
        %v1159 = vmul.f32 %v1149, %v1039
        %v1160 = vmul.f32 %v1156, %v1044
        %v1161 = vadd.f32 %v1157, %v1158
        %v1162 = vadd.f32 %v1161, %v1159
        %v1163 = vadd.f32 %v1162, %v1160
        %v1164 = vlaneseq
        %v1165 = vshrl.u32 %v1164, 7
        %v1166 = vsub.s32 2, %v1165
        %v1167 = vrot.slane %v484, %v1166
        %v1168 = vmul.f32 %v1163, %v1167
        %v1169 = vadd.f32 %v1128, %v1168
        %v1170 = vlaneseq
        %v1171 = vshrl.u32 %v1170, 7
        %v1172 = vsub.s32 3, %v1171
        %v1173 = vrot.slane %v801, %v1172
        %1175 = vbcast.lane.b32.xlu0 %v1173, 256
        %v1176 = vpop.permute.xlu0 %1175
        %v1177 = vlaneseq
        %v1178 = vshrl.u32 %v1177, 7
        %v1179 = vsub.s32 3, %v1178
        %v1180 = vrot.slane %v802, %v1179
        %1182 = vbcast.lane.b32.xlu0 %v1180, 256
        %v1183 = vpop.permute.xlu0 %1182
        %v1184 = vlaneseq
        %v1185 = vshrl.u32 %v1184, 7
        %v1186 = vsub.s32 3, %v1185
        %v1187 = vrot.slane %v803, %v1186
        %1189 = vbcast.lane.b32.xlu0 %v1187, 256
        %v1190 = vpop.permute.xlu0 %1189
        %v1191 = vlaneseq
        %v1192 = vshrl.u32 %v1191, 7
        %v1193 = vsub.s32 3, %v1192
        %v1194 = vrot.slane %v804, %v1193
        %1196 = vbcast.lane.b32.xlu0 %v1194, 256
        %v1197 = vpop.permute.xlu0 %1196
        %v1198 = vmul.f32 %v1176, %v1029
        %v1199 = vmul.f32 %v1183, %v1034
        %v1200 = vmul.f32 %v1190, %v1039
        %v1201 = vmul.f32 %v1197, %v1044
        %v1202 = vadd.f32 %v1198, %v1199
        %v1203 = vadd.f32 %v1202, %v1200
        %v1204 = vadd.f32 %v1203, %v1201
        %v1205 = vlaneseq
        %v1206 = vshrl.u32 %v1205, 7
        %v1207 = vsub.s32 3, %v1206
        %v1208 = vrot.slane %v484, %v1207
        %v1209 = vmul.f32 %v1204, %v1208
        %v1210 = vadd.f32 %v1169, %v1209
        %1211 = vst [vmem:[%s463] sm:$0xff] %v1210
        %s1212 = sand.u32 %s252, 1
        %s1213 = scalar_lea.sflag [#allocation4], %s1212
        %s1214 = sand.u32 %s252, 1
        %s1215 = smul.addr %s1214, 8
        %s1216 = scalar_lea.vmem [#allocation10], %s1215
        // Predicated region
        $region69: #{tpu_custom_call.1} parent=51 // pred_check
          %p1217 = pneg %p262
        $region70: #{tpu_custom_call.1} parent=51 // pred_check_branch
          %1219 = sbr.rel (%p1217) target = $region72
        $region71: #{tpu_custom_call.1} parent=51 // pred_region
          %s1221 = ssub.s32 128, 128
          %1222 = vsyncadd %s1213, %s1221
          %s1223 = sadd.s32 %s34, %s33
          %s1224 = smul.addr %s1223, 128
          %s1225 = scalar_lea.hbm %s8, %s1224
          %s1227 = sshll.u32 %s1216, 4
          %s1228 = int_to_ptr.vmem [resolvable:$true] %s1227
          %1230 = dma.vmem_to_hbm [thread:$0]  %s1228, 128, %s1225, %s1213
        $region72: #{tpu_custom_call.1} parent=51 // pred_fallthru
          _
      $region52: #{tpu_custom_call.1} parent=5 // pred_fallthru
        _
      %p1231 = scmp.le.s32.totalorder 2, %s24
      // Predicated region
      $region73: #{tpu_custom_call.1} parent=5 // pred_check
        %p1232 = pneg %p1231
      $region74: #{tpu_custom_call.1} parent=5 // pred_check_branch
        %1234 = sbr.rel (%p1232) target = $region76
      $region75: #{tpu_custom_call.1} parent=5 // pred_region
        %s1235 = ssub.s32 %s24, 2
        // Predicated region
        $region77: #{tpu_custom_call.1} parent=75 // pred_check
          %p1236 = pneg %p268
        $region78: #{tpu_custom_call.1} parent=75 // pred_check_branch
          %1238 = sbr.rel (%p1236) target = $region80
        $region79: #{tpu_custom_call.1} parent=75 // pred_region
          %s1239 = sand.u32 %s253, 1
          %s1240 = scalar_lea.sflag [#allocation4], %s1239
          %s1241 = sand.u32 %s253, 1
          %s1242 = smul.addr %s1241, 8
          %s1243 = scalar_lea.vmem [#allocation10], %s1242
          %1244 = dma.done %s1240, 128
        $region80: #{tpu_custom_call.1} parent=75 // pred_fallthru
          _
      $region76: #{tpu_custom_call.1} parent=5 // pred_fallthru
        _
    $region6: #{tpu_custom_call.1} parent=1 // loop_footer
      %s28 = sadd.s32 1, %s24
    $region7: #{tpu_custom_call.1} parent=1 // loop_footer_branch
      %23 = sbr.rel target = $region3
    $region8: #{tpu_custom_call.1} parent=1 // loop_exit
      _
    %1245 = vsyncpa [#allocation3], 1
    %s1246 = scalar_lea.sflag [#allocation3], 1
    %1247 = vsyncpa %s1246, 1
    %1248 = vsyncpa [#allocation6], 1
    %s1249 = scalar_lea.sflag [#allocation6], 1
    %1250 = vsyncpa %s1249, 1
    %1251 = vsyncpa [#allocation9], 1
    %1252 = vsyncpa [#allocation4], 1
    %s1253 = scalar_lea.sflag [#allocation4], 1
    %1254 = vsyncpa %s1253, 1

</llo_original>
